<compile_context>
chip_gen: v7x
topology: tpu7x:2x2x1
jax: 0.10.0
libtpu: 0.0.40
codegen_flags: <defaults>
</compile_context>

<pallas_src>
import jax
import jax.numpy as jnp
from jax import lax
from jax.experimental import pallas as pl
from jax.experimental.pallas import tpu as pltpu

# ---------------- model hyper-parameters (small, consistent with module) ----
B = 2             # batch
INPUT_LEN = 16    # sequence length (MLP in_dim for c_type='None')
INPUT_DIM = 4     # channels (== out_dim so c_type stays 'None')
OUT_LEN = 8       # output sequence length
HIDDEN = 32       # hidden_dim
RADIO = 2         # is_mean_std=True
OUT_FEAT = OUT_LEN * RADIO          # 16
LN_EPS = 1e-5
_INV_SQRT2 = 0.7071067811865476

LANES = 128                          # lane-pad the batched column axis to a full vreg
COLS = B * INPUT_DIM                 # 8 meaningful columns
PARAM_ROWS = HIDDEN + OUT_FEAT       # 48
PARAM_COLS = 48                      # >= max(INPUT_LEN, HIDDEN) + 1 bias column


# ---------------- fused Pallas kernel ---------------------------------------
# Transposed + batched orientation (columns = b*INPUT_DIM + d, lane-padded to 128):
#   H  = W1^T(H,L) @ X(L,128) + b1            -> (32, 128)   (permute(0,2,1) is implicit)
#   G  = GELU_exact(H)
#   N  = (G - mean_h) * rsqrt(var_h + eps)     (LN over the hidden/sublane axis)
#   Y  = W2'^T(F,H) @ N + b2'                 -> (16, 128)   (gamma/beta folded in)
# The wrapper slices the 8 real columns and splits them into (mean, std).
def _base_net_kernel(x_ref, p_ref, out_ref):
    # Static slices of the packed parameter slab (zero runtime indexing cost).
    w1t = p_ref[0:HIDDEN, 0:INPUT_LEN]                          # (32, 16)
    b1 = p_ref[0:HIDDEN, INPUT_LEN:INPUT_LEN + 1]               # (32, 1)
    w2t = p_ref[HIDDEN:HIDDEN + OUT_FEAT, 0:HIDDEN]             # (16, 32)  gamma folded
    b2 = p_ref[HIDDEN:HIDDEN + OUT_FEAT, HIDDEN:HIDDEN + 1]     # (16, 1)   beta folded

    x = x_ref[...]                                              # (16, 128) lane-padded

    # Linear 1 (single MXU push for all batch elements).
    h = jnp.dot(w1t, x, preferred_element_type=jnp.float32) + b1        # (32, 128)

    # GELU (exact, erf-based -- matches torch.nn.GELU default).
    h = 0.5 * h * (1.0 + lax.erf(h * _INV_SQRT2))

    # LayerNorm over the hidden axis (sublane axis); affine folded into W2/b2.
    mu = jnp.mean(h, axis=0, keepdims=True)                             # (1, 128)
    c = h - mu
    var = jnp.mean(c * c, axis=0, keepdims=True)
    hn = c * lax.rsqrt(var + LN_EPS)                                    # (32, 128)

    # Linear 2 (single MXU push) with folded LN affine.
    y = jnp.dot(w2t, hn, preferred_element_type=jnp.float32) + b2       # (16, 128)

    # Dropout(p=0) == identity.  Single lane-dense unmasked store.
    out_ref[...] = y.astype(out_ref.dtype)


def _vmem_spec(shape):
    return pl.BlockSpec(shape, lambda: (0,) * len(shape),
                        memory_space=pltpu.MemorySpace.VMEM)


@jax.jit
def base_net_forward(x, packed_params):
    """x: (B, INPUT_LEN, INPUT_DIM) -> (mean, std), each (B, OUT_LEN, INPUT_DIM)."""
    # permute(0,2,1) + batch-flatten + lane-pad: tiny XLA ops on a 512-byte array.
    xt = jnp.transpose(x, (1, 0, 2)).reshape(INPUT_LEN, COLS)
    xw = jnp.pad(xt, ((0, 0), (0, LANES - COLS)))                       # (16, 128)

    flops = 2 * COLS * (INPUT_LEN * HIDDEN + HIDDEN * OUT_FEAT)
    bytes_accessed = 4 * (INPUT_LEN * LANES + PARAM_ROWS * PARAM_COLS + OUT_FEAT * LANES)

    y = pl.pallas_call(
        _base_net_kernel,
        out_shape=jax.ShapeDtypeStruct((OUT_FEAT, LANES), jnp.float32),
        in_specs=[
            _vmem_spec((INPUT_LEN, LANES)),
            _vmem_spec((PARAM_ROWS, PARAM_COLS)),
        ],
        out_specs=_vmem_spec((OUT_FEAT, LANES)),
        cost_estimate=pl.CostEstimate(
            flops=flops,
            transcendentals=COLS * HIDDEN,
            bytes_accessed=bytes_accessed),
    )(xw, packed_params)

    # permute-back + chunk(dim=1) on the 512 meaningful bytes (outside the kernel).
    y = y[:, :COLS].reshape(OUT_FEAT, B, INPUT_DIM)
    y = jnp.transpose(y, (1, 0, 2))                                     # (B, 16, 4)
    return y[:, :OUT_LEN, :], y[:, OUT_LEN:, :]


# ---------------- parameter handling ----------------------------------------
def init_params(key):
    """Parameters in 'math' orientation: w1 (L,H), w2 (H,F), LN gamma/beta (H,)."""
    k1, k2, k3, k4 = jax.random.split(key, 4)
    s1 = 1.0 / jnp.sqrt(INPUT_LEN)
    w1 = jax.random.uniform(k1, (INPUT_LEN, HIDDEN), jnp.float32, -s1, s1)
    b1 = jax.random.uniform(k2, (HIDDEN,), jnp.float32, -s1, s1)
    gamma = jnp.ones((HIDDEN,), jnp.float32)     # LayerNorm default weight
    beta = jnp.zeros((HIDDEN,), jnp.float32)     # LayerNorm default bias
    s2 = 1.0 / jnp.sqrt(HIDDEN)
    w2 = jax.random.uniform(k3, (HIDDEN, OUT_FEAT), jnp.float32, -s2, s2)
    b2 = jax.random.uniform(k4, (OUT_FEAT,), jnp.float32, -s2, s2)
    return (w1, b1, gamma, beta, w2, b2)


def fold_params(params):
    """One-time prep (off the hot path): transpose weights to kernel orientation, fold
    the LayerNorm affine into the second linear, and pack everything into ONE slab."""
    w1, b1, gamma, beta, w2, b2 = params
    w2g = w2 * gamma[:, None]                    # gamma folded into W2
    b2f = beta @ w2 + b2                         # beta folded into b2
    slab = jnp.zeros((PARAM_ROWS, PARAM_COLS), jnp.float32)
    slab = slab.at[0:HIDDEN, 0:INPUT_LEN].set(w1.T)                     # (32,16)
    slab = slab.at[0:HIDDEN, INPUT_LEN].set(b1)                         # col 16
    slab = slab.at[HIDDEN:HIDDEN + OUT_FEAT, 0:HIDDEN].set(w2g.T)       # (16,32)
    slab = slab.at[HIDDEN:HIDDEN + OUT_FEAT, HIDDEN].set(b2f)           # col 32
    return slab


if __name__ == "__main__":
    key = jax.random.PRNGKey(0)
    kx, kp = jax.random.split(key)
    x = jax.random.normal(kx, (B, INPUT_LEN, INPUT_DIM), jnp.float32)
    params = init_params(kp)
    packed = jax.device_put(fold_params(params))   # fold/pack once, off hot path

    mean, std = base_net_forward(x, packed)
    jax.block_until_ready((mean, std))

    # Pure-JAX reference (unfolded params, original PyTorch orientation).
    w1, b1, gamma, beta, w2, b2 = params
    xp = jnp.transpose(x, (0, 2, 1))                        # (B, D, L)
    h = xp @ w1 + b1
    h = 0.5 * h * (1.0 + lax.erf(h / jnp.sqrt(2.0)))
    mu = jnp.mean(h, axis=-1, keepdims=True)
    var = jnp.mean((h - mu) ** 2, axis=-1, keepdims=True)
    hn = (h - mu) * lax.rsqrt(var + LN_EPS) * gamma + beta
    yref = jnp.transpose(hn @ w2 + b2, (0, 2, 1))           # (B, F, D)
    mref, sref = yref[:, :OUT_LEN, :], yref[:, OUT_LEN:, :]

    assert mean.shape == (B, OUT_LEN, INPUT_DIM) and std.shape == (B, OUT_LEN, INPUT_DIM)
    assert jnp.allclose(mean, mref, atol=1e-5, rtol=1e-5)
    assert jnp.allclose(std, sref, atol=1e-5, rtol=1e-5)
    print("KERNEL_OK")
</pallas_src>

<mosaic_0001>
module attributes {stable_mosaic.version = 11 : i64} {
  func.func @_base_net_kernel(%arg0: memref<16x128xf32, #tpu.memory_space<vmem>>, %arg1: memref<48x48xf32, #tpu.memory_space<vmem>>, %arg2: memref<16x128xf32, #tpu.memory_space<vmem>>) attributes {dimension_semantics = [], scalar_prefetch = 0 : i64, scratch_operands = 0 : i64, tpu.core_type = #tpu.core_type<tc>} {
    %c0 = arith.constant 0 : index
    %c0_0 = arith.constant 0 : index
    %0 = vector.load %arg1[%c0, %c0_0] : memref<48x48xf32, #tpu.memory_space<vmem>>, vector<32x16xf32>
    %c0_1 = arith.constant 0 : index
    %c16 = arith.constant 16 : index
    %1 = vector.load %arg1[%c0_1, %c16] : memref<48x48xf32, #tpu.memory_space<vmem>>, vector<32x1xf32>
    %c32 = arith.constant 32 : index
    %c0_2 = arith.constant 0 : index
    %2 = vector.load %arg1[%c32, %c0_2] : memref<48x48xf32, #tpu.memory_space<vmem>>, vector<16x32xf32>
    %c32_3 = arith.constant 32 : index
    %c32_4 = arith.constant 32 : index
    %3 = vector.load %arg1[%c32_3, %c32_4] : memref<48x48xf32, #tpu.memory_space<vmem>>, vector<16x1xf32>
    %c0_5 = arith.constant 0 : index
    %c0_6 = arith.constant 0 : index
    %4 = vector.load %arg0[%c0_5, %c0_6] : memref<16x128xf32, #tpu.memory_space<vmem>>, vector<16x128xf32>
    %cst = arith.constant dense<0.000000e+00> : vector<32x128xf32>
    %5 = tpu.matmul %0, %4, %cst {dimension_numbers = #tpu.dot_dimension_numbers<[1], [0], [0], [1], [0, 0, 1, 1], [], []>} : vector<32x16xf32>, vector<16x128xf32>, vector<32x128xf32> -> vector<32x128xf32>
    %6 = vector.broadcast %1 : vector<32x1xf32> to vector<32x128xf32>
    %7 = arith.addf %5, %6 : vector<32x128xf32>
    %cst_7 = arith.constant 5.000000e-01 : f32
    %8 = vector.broadcast %cst_7 : f32 to vector<32x128xf32>
    %9 = arith.mulf %8, %7 : vector<32x128xf32>
    %cst_8 = arith.constant 0.707106769 : f32
    %10 = vector.broadcast %cst_8 : f32 to vector<32x128xf32>
    %11 = arith.mulf %7, %10 : vector<32x128xf32>
    %12 = math.erf %11 : vector<32x128xf32>
    %cst_9 = arith.constant 1.000000e+00 : f32
    %13 = vector.broadcast %cst_9 : f32 to vector<32x128xf32>
    %14 = arith.addf %13, %12 : vector<32x128xf32>
    %15 = arith.mulf %9, %14 : vector<32x128xf32>
    %cst_10 = arith.constant dense<0.000000e+00> : vector<128xf32>
    %16 = vector.multi_reduction <add>, %15, %cst_10 [0] : vector<32x128xf32> to vector<128xf32>
    %17 = vector.shape_cast %16 : vector<128xf32> to vector<1x128xf32>
    %cst_11 = arith.constant 3.200000e+01 : f32
    %18 = vector.broadcast %cst_11 : f32 to vector<1x128xf32>
    %19 = arith.divf %17, %18 : vector<1x128xf32>
    %20 = vector.broadcast %19 : vector<1x128xf32> to vector<32x128xf32>
    %21 = arith.subf %15, %20 : vector<32x128xf32>
    %22 = arith.mulf %21, %21 : vector<32x128xf32>
    %cst_12 = arith.constant dense<0.000000e+00> : vector<128xf32>
    %23 = vector.multi_reduction <add>, %22, %cst_12 [0] : vector<32x128xf32> to vector<128xf32>
    %24 = vector.shape_cast %23 : vector<128xf32> to vector<1x128xf32>
    %cst_13 = arith.constant 3.200000e+01 : f32
    %25 = vector.broadcast %cst_13 : f32 to vector<1x128xf32>
    %26 = arith.divf %24, %25 : vector<1x128xf32>
    %cst_14 = arith.constant 9.99999974E-6 : f32
    %27 = vector.broadcast %cst_14 : f32 to vector<1x128xf32>
    %28 = arith.addf %26, %27 : vector<1x128xf32>
    %29 = math.rsqrt %28 : vector<1x128xf32>
    %30 = vector.broadcast %29 : vector<1x128xf32> to vector<32x128xf32>
    %31 = arith.mulf %21, %30 : vector<32x128xf32>
    %cst_15 = arith.constant dense<0.000000e+00> : vector<16x128xf32>
    %32 = tpu.matmul %2, %31, %cst_15 {dimension_numbers = #tpu.dot_dimension_numbers<[1], [0], [0], [1], [0, 0, 1, 1], [], []>} : vector<16x32xf32>, vector<32x128xf32>, vector<16x128xf32> -> vector<16x128xf32>
    %33 = vector.broadcast %3 : vector<16x1xf32> to vector<16x128xf32>
    %34 = arith.addf %32, %33 : vector<16x128xf32>
    %c0_16 = arith.constant 0 : index
    %c0_17 = arith.constant 0 : index
    %35 = vector.load %arg2[%c0_16, %c0_17] : memref<16x128xf32, #tpu.memory_space<vmem>>, vector<16x128xf32>
    tpu.vector_store %arg2[%c0_16, %c0_17], %34 {strides = array<i32>} : memref<16x128xf32, #tpu.memory_space<vmem>>, vector<16x128xf32>,
    return
  }
}

</mosaic_0001>

<llo_original>
// kernel: base_net_forward.1
$region0: #{base_net_forward.1}
  #allocation0 [shape = 'u32[]', space=smem, size = 0x4, offset = 0x4, fixed_abs, tag = 'smem constant byte address 0x4 - core index']
  #allocation1 [shape = 'u32[144,128]{1,0:T(1,128)}', space=vmem, size = 0x12000, scoped, tag = 'internal scratch']
  %s0 = inlined_call_operand.vmem [shape: f32[16,128], index: 0, kind: input, shape index: {}]
  %s1 = inlined_call_operand.vmem [shape: f32[48,48], index: 1, kind: input, shape index: {}]
  %s2 = inlined_call_operand.vmem [shape: f32[16,128], index: 2, kind: output, shape index: {}]
  %s3 = sld [smem:[#allocation0]]
  $region18: #{base_net_forward.1} parent=0
    _
  %s5 = ssub.s32 1, %s3
  %s6 = scalar_select 0, %s5, %s3
  // Predicated region
  $region2: #{base_net_forward.1} parent=0 // pred_check
    _
  $region3: #{base_net_forward.1} parent=0 // pred_check_branch
    %8 = sbr.rel (0) target = $region5
  $region4: #{base_net_forward.1} parent=0 // pred_region
    _
  $region5: #{base_net_forward.1} parent=0 // pred_fallthru
    _
  // Predicated region
  $region6: #{base_net_forward.1} parent=0 // pred_check
    _
  $region7: #{base_net_forward.1} parent=0 // pred_check_branch
    %10 = sbr.rel (0) target = $region9
  $region8: #{base_net_forward.1} parent=0 // pred_region
    _
  $region9: #{base_net_forward.1} parent=0 // pred_fallthru
    _
  %v11 = vld [vmem:[%s1] sm:$0xff]
  %v12 = vld [vmem:[%s1 + $0x8] sm:$0xff]
  %v13 = vld [vmem:[%s1 + $0x10] sm:$0xff]
  %v14 = vld [vmem:[%s1 + $0x18] sm:$0xff]
  %v15 = vld [vmem:[%s1 + $0x20] sm:$0xff]
  %v16 = vld [vmem:[%s1 + $0x28] sm:$0xff]
  %v17 = vld [vmem:[%s0] sm:$0xff]
  %v18 = vld [vmem:[%s0 + $0x8] sm:$0xff]
  %20 = vset.pattern.permute.xlu0 16
  %21 = vperm.xlu0 %20, %v11
  %v22 = vpop.permute.xlu0 %21
  %25 = vset.pattern.permute.xlu0 16
  %26 = vperm.xlu0 %25, %v12
  %v27 = vpop.permute.xlu0 %26
  %30 = vset.pattern.permute.xlu0 16
  %31 = vperm.xlu0 %30, %v13
  %v32 = vpop.permute.xlu0 %31
  %35 = vset.pattern.permute.xlu0 16
  %36 = vperm.xlu0 %35, %v14
  %v37 = vpop.permute.xlu0 %36
  %vm39 = vcmask 130048
  %v40 = vsel %vm39, %v11, 0
  %v42 = vsel %vm39, %v12, 0
  %v44 = vsel %vm39, %v13, 0
  %v46 = vsel %vm39, %v14, 0
  %48 = vmatprep.subr.mxu0 0.0
  %49 = vmatpush1.msra.mxu0 %v17
  %50 = vmatprep.subr.mxu0 0.0
  %51 = vmatpush1.msra.mxu0 %v18
  %52 = vmatprep.subr.mxu0 0.0
  %53 = vmatpush1.msra.mxu0 0.0
  %54 = vmatprep.subr.mxu0 0.0
  %55 = vmatpush1.msra.mxu0 0.0
  %56 = vmatprep.subr.mxu0 0.0
  %57 = vmatpush1.msra.mxu0 0.0
  %58 = vmatprep.subr.mxu0 0.0
  %59 = vmatpush1.msra.mxu0 0.0
  %60 = vmatprep.subr.mxu0 0.0
  %61 = vmatpush1.msra.mxu0 0.0
  %62 = vmatprep.subr.mxu0 0.0
  %63 = vmatpush1.msra.mxu0 0.0
  %64 = vmatprep.subr.mxu0 0.0
  %65 = vmatpush1.msra.mxu0 0.0
  %66 = vmatprep.subr.mxu0 0.0
  %67 = vmatpush1.msra.mxu0 0.0
  %68 = vmatprep.subr.mxu0 0.0
  %69 = vmatpush1.msra.mxu0 0.0
  %70 = vmatprep.subr.mxu0 0.0
  %71 = vmatpush1.msra.mxu0 0.0
  %72 = vmatprep.subr.mxu0 0.0
  %73 = vmatpush1.msra.mxu0 0.0
  %74 = vmatprep.subr.mxu0 0.0
  %75 = vmatpush1.msra.mxu0 0.0
  %76 = vmatprep.subr.mxu0 0.0
  %77 = vmatpush1.msra.mxu0 0.0
  %78 = vmatprep.subr.mxu0 0.0
  %79 = vmatpush1.msra.mxu0 0.0
  %80 = vmatprep.subr.mxu0 0.0
  %81 = vmatpush1.msra.mxu0 0.0
  %82 = vmatprep.subr.mxu0 0.0
  %83 = vmatpush1.msra.mxu0 0.0
  %84 = vmatprep.subr.mxu0 0.0
  %85 = vmatpush1.msra.mxu0 0.0
  %86 = vmatprep.subr.mxu0 0.0
  %87 = vmatpush1.msra.mxu0 0.0
  %88 = vmatprep.subr.mxu0 0.0
  %89 = vmatpush1.msra.mxu0 0.0
  %90 = vmatprep.subr.mxu0 0.0
  %91 = vmatpush1.msra.mxu0 0.0
  %92 = vmatprep.subr.mxu0 0.0
  %93 = vmatpush1.msra.mxu0 0.0
  %94 = vmatprep.subr.mxu0 0.0
  %95 = vmatpush1.msra.mxu0 0.0
  %96 = vmatprep.subr.mxu0 0.0
  %97 = vmatpush1.msra.mxu0 0.0
  %98 = vmatprep.subr.mxu0 0.0
  %99 = vmatpush1.msra.mxu0 0.0
  %100 = vmatprep.subr.mxu0 0.0
  %101 = vmatpush1.msra.mxu0 0.0
  %102 = vmatprep.subr.mxu0 0.0
  %103 = vmatpush1.msra.mxu0 0.0
  %104 = vmatprep.subr.mxu0 0.0
  %105 = vmatpush1.msra.mxu0 0.0
  %106 = vmatprep.subr.mxu0 0.0
  %107 = vmatpush1.msra.mxu0 0.0
  %108 = vmatprep.subr.mxu0 0.0
  %109 = vmatpush1.msra.mxu0 0.0
  %110 = vmatprep.subr.mxu0 0.0
  %111 = vmatpush1.msra.mxu0 0.0
  %112 = vmatprep.mubr.f32.mxu0 0.0
  %113 = vmatmul.mubr.f32.gmra.mrb[0].mxu0 %v40
  %v114 = vpop.f32.mrb[0].mxu0
  %v115 = vadd.f32 %v22, %v114
  %v116 = vpop.f32.mrb[0].mxu0
  %117 = vmatprep.mubr.f32.mxu0 0.0
  %118 = vmatmul.mubr.f32.gmra.mrb[0].mxu0 %v42
  %v119 = vpop.f32.mrb[0].mxu0
  %v120 = vadd.f32 %v27, %v119
  %v121 = vpop.f32.mrb[0].mxu0
  %122 = vmatprep.mubr.f32.mxu0 0.0
  %123 = vmatmul.mubr.f32.gmra.mrb[0].mxu0 %v44
  %v124 = vpop.f32.mrb[0].mxu0
  %v125 = vadd.f32 %v32, %v124
  %v126 = vpop.f32.mrb[0].mxu0
  %127 = vmatprep.mubr.f32.mxu0 0.0
  %128 = vmatmul.mubr.f32.gmra.mrb[0].mxu0 %v46
  %v129 = vpop.f32.mrb[0].mxu0
  %v130 = vadd.f32 %v37, %v129
  %v131 = vpop.f32.mrb[0].mxu0
  %132 = vdwg.mxu0
  %v133 = vmul.f32 %v115, 0.5
  %v134 = vmul.f32 %v120, 0.5
  %v135 = vmul.f32 %v125, 0.5
  %v136 = vmul.f32 %v130, 0.5
  %v137 = vmul.f32 %v115, 0.70710677
  %v138 = vmul.f32 %v120, 0.70710677
  %v139 = vmul.f32 %v125, 0.70710677
  %v140 = vmul.f32 %v130, 0.70710677
  %v141 = verf.f32.pop %v137
  %v142 = verf.f32.pop %v138
  %v143 = verf.f32.pop %v139
  %v144 = verf.f32.pop %v140
  %v145 = vadd.f32 %v141, 1.0
  %v146 = vadd.f32 %v142, 1.0
  %v147 = vadd.f32 %v143, 1.0
  %v148 = vadd.f32 %v144, 1.0
  %v149 = vmul.f32 %v133, %v145
  %v150 = vmul.f32 %v134, %v146
  %v151 = vmul.f32 %v135, %v147
  %v152 = vmul.f32 %v136, %v148
  %v153 = vadd.f32 %v149, %v150
  %v154 = vadd.f32 %v153, %v151
  %v155 = vadd.f32 %v154, %v152
  %v156 = vrot.slane %v155, 4
  %v157 = vadd.f32 %v155, %v156
  %v158 = vrot.slane %v157, 2
  %v159 = vadd.f32 %v157, %v158
  %v160 = vrot.slane %v159, 1
  %v161 = vadd.f32 %v159, %v160
  %v162 = vrcp.pop 32.0
  %v163 = vmul.f32 %v161, %v162
  %v164 = vsub.f32 %v149, %v163
  %v165 = vsub.f32 %v150, %v163
  %v166 = vsub.f32 %v151, %v163
  %v167 = vsub.f32 %v152, %v163
  %v168 = vmul.f32 %v164, %v164
  %v169 = vmul.f32 %v165, %v165
  %v170 = vmul.f32 %v166, %v166
  %v171 = vmul.f32 %v167, %v167
  %v172 = vadd.f32 %v168, %v169
  %v173 = vadd.f32 %v172, %v170
  %v174 = vadd.f32 %v173, %v171
  %v175 = vrot.slane %v174, 4
  %v176 = vadd.f32 %v174, %v175
  %v177 = vrot.slane %v176, 2
  %v178 = vadd.f32 %v176, %v177
  %v179 = vrot.slane %v178, 1
  %v180 = vadd.f32 %v178, %v179
  %v181 = vmul.f32 %v180, %v162
  %v182 = vadd.f32 %v181, 1e-05
  %v183 = vrsqrt.pop %v182
  %v184 = vmul.f32 %v164, %v183
  %v185 = vmul.f32 %v165, %v183
  %v186 = vmul.f32 %v166, %v183
  %v187 = vmul.f32 %v167, %v183
  %189 = vset.pattern.permute.xlu0 32
  %190 = vperm.xlu0 %189, %v15
  %v191 = vpop.permute.xlu0 %190
  %194 = vset.pattern.permute.xlu0 32
  %195 = vperm.xlu0 %194, %v16
  %v196 = vpop.permute.xlu0 %195
  %vm198 = vcmask 261120
  %v199 = vsel %vm198, %v15, 0
  %v201 = vsel %vm198, %v16, 0
  %203 = vmatprep.subr.mxu0 0.0
  %204 = vmatpush1.msra.mxu0 %v184
  %205 = vmatprep.subr.mxu0 0.0
  %206 = vmatpush1.msra.mxu0 %v185
  %207 = vmatprep.subr.mxu0 0.0
  %208 = vmatpush1.msra.mxu0 %v186
  %209 = vmatprep.subr.mxu0 0.0
  %210 = vmatpush1.msra.mxu0 %v187
  %211 = vmatprep.subr.mxu0 0.0
  %212 = vmatpush1.msra.mxu0 0.0
  %213 = vmatprep.subr.mxu0 0.0
  %214 = vmatpush1.msra.mxu0 0.0
  %215 = vmatprep.subr.mxu0 0.0
  %216 = vmatpush1.msra.mxu0 0.0
  %217 = vmatprep.subr.mxu0 0.0
  %218 = vmatpush1.msra.mxu0 0.0
  %219 = vmatprep.subr.mxu0 0.0
  %220 = vmatpush1.msra.mxu0 0.0
  %221 = vmatprep.subr.mxu0 0.0
  %222 = vmatpush1.msra.mxu0 0.0
  %223 = vmatprep.subr.mxu0 0.0
  %224 = vmatpush1.msra.mxu0 0.0
  %225 = vmatprep.subr.mxu0 0.0
  %226 = vmatpush1.msra.mxu0 0.0
  %227 = vmatprep.subr.mxu0 0.0
  %228 = vmatpush1.msra.mxu0 0.0
  %229 = vmatprep.subr.mxu0 0.0
  %230 = vmatpush1.msra.mxu0 0.0
  %231 = vmatprep.subr.mxu0 0.0
  %232 = vmatpush1.msra.mxu0 0.0
  %233 = vmatprep.subr.mxu0 0.0
  %234 = vmatpush1.msra.mxu0 0.0
  %235 = vmatprep.subr.mxu0 0.0
  %236 = vmatpush1.msra.mxu0 0.0
  %237 = vmatprep.subr.mxu0 0.0
  %238 = vmatpush1.msra.mxu0 0.0
  %239 = vmatprep.subr.mxu0 0.0
  %240 = vmatpush1.msra.mxu0 0.0
  %241 = vmatprep.subr.mxu0 0.0
  %242 = vmatpush1.msra.mxu0 0.0
  %243 = vmatprep.subr.mxu0 0.0
  %244 = vmatpush1.msra.mxu0 0.0
  %245 = vmatprep.subr.mxu0 0.0
  %246 = vmatpush1.msra.mxu0 0.0
  %247 = vmatprep.subr.mxu0 0.0
  %248 = vmatpush1.msra.mxu0 0.0
  %249 = vmatprep.subr.mxu0 0.0
  %250 = vmatpush1.msra.mxu0 0.0
  %251 = vmatprep.subr.mxu0 0.0
  %252 = vmatpush1.msra.mxu0 0.0
  %253 = vmatprep.subr.mxu0 0.0
  %254 = vmatpush1.msra.mxu0 0.0
  %255 = vmatprep.subr.mxu0 0.0
  %256 = vmatpush1.msra.mxu0 0.0
  %257 = vmatprep.subr.mxu0 0.0
  %258 = vmatpush1.msra.mxu0 0.0
  %259 = vmatprep.subr.mxu0 0.0
  %260 = vmatpush1.msra.mxu0 0.0
  %261 = vmatprep.subr.mxu0 0.0
  %262 = vmatpush1.msra.mxu0 0.0
  %263 = vmatprep.subr.mxu0 0.0
  %264 = vmatpush1.msra.mxu0 0.0
  %265 = vmatprep.subr.mxu0 0.0
  %266 = vmatpush1.msra.mxu0 0.0
  %267 = vmatprep.mubr.f32.mxu0 0.0
  %268 = vmatmul.mubr.f32.gmra.mrb[0].mxu0 %v199
  %v269 = vpop.f32.mrb[0].mxu0
  %v270 = vadd.f32 %v191, %v269
  %v271 = vpop.f32.mrb[0].mxu0
  %272 = vmatprep.mubr.f32.mxu0 0.0
  %273 = vmatmul.mubr.f32.gmra.mrb[0].mxu0 %v201
  %v274 = vpop.f32.mrb[0].mxu0
  %v275 = vadd.f32 %v196, %v274
  %v276 = vpop.f32.mrb[0].mxu0
  %277 = vdwg.mxu0
  %278 = vst [vmem:[%s2] sm:$0xff] %v270
  %279 = vst [vmem:[%s2 + $0x8] sm:$0xff] %v275
  // Predicated region
  $region10: #{base_net_forward.1} parent=0 // pred_check
    _
  $region11: #{base_net_forward.1} parent=0 // pred_check_branch
    %281 = sbr.rel (0) target = $region13
  $region12: #{base_net_forward.1} parent=0 // pred_region
    _
  $region13: #{base_net_forward.1} parent=0 // pred_fallthru
    _
  // Predicated region
  $region14: #{base_net_forward.1} parent=0 // pred_check
    _
  $region15: #{base_net_forward.1} parent=0 // pred_check_branch
    %283 = sbr.rel (0) target = $region17
  $region16: #{base_net_forward.1} parent=0 // pred_region
    _
  $region17: #{base_net_forward.1} parent=0 // pred_fallthru
    _

</llo_original>
